<compile_context>
chip_gen: v5e
topology: v5e:2x2
jax: 0.10.0
libtpu: 0.0.40
codegen_flags: <defaults>
</compile_context>

<pallas_src>
import math
from functools import partial

import jax
import jax.numpy as jnp
from jax.experimental import pallas as pl
from jax.experimental.pallas import tpu as pltpu


def _gap_kernel(x_ref, o_ref, *, inv_hw):
    # x_ref: (n_tile, c_tile, HW) in VMEM ; o_ref: (n_tile, c_tile)
    x = x_ref[...].astype(jnp.float32)        # f32 accumulation in-VMEM
    mean = jnp.sum(x, axis=-1) * inv_hw       # lane reduction + cheap scale
    o_ref[...] = mean.astype(o_ref.dtype)


def _largest_tile(full, quantum, max_tile):
    """Largest multiple of `quantum` that divides `full` and is <= max_tile.

    Falls back to the smallest legal multiple, then to `full` (a full-extent
    block dim is always layout-legal) if no suitable divisor exists.
    """
    if full <= max_tile:
        return full
    t = max((max_tile // quantum) * quantum, quantum)
    while t >= quantum:
        if full % t == 0:
            return t
        t -= quantum
    return full


def global_avg_pooling(x, *, vmem_budget_bytes=6 * 1024 * 1024):
    """Pallas equivalent of GlobalAvgPooling.forward: x.view(N, C, -1).mean(-1).

    x: (N, C, *spatial) NCHW-style array. Returns (N, C) with the same dtype.
    # TODO(synk): integer-dtype inputs would need explicit rounding semantics
    # (torch.mean rejects integer tensors anyway); float dtypes are exact here.
    """
    n, c = x.shape[0], x.shape[1]
    hw = math.prod(x.shape[2:]) if x.ndim > 2 else 1
    x_flat = x.reshape(n, c, hw)

    itemsize = jnp.dtype(x.dtype).itemsize
    sublane_q = max(1, 32 // itemsize)          # 8 (f32) / 16 (bf16) / 32 (int8)
    hw_padded = ((hw + 127) // 128) * 128       # VMEM pads lanes to mult. of 128

    # Channels first: multiple of 128 -> lane-dense output stores and a legal
    # sublane count for the input block. Then fill remaining budget with rows.
    c_tile = _largest_tile(
        c, 128, max(1, vmem_budget_bytes // (hw_padded * itemsize)))
    row_bytes = c_tile * hw_padded * itemsize
    n_tile = _largest_tile(n, sublane_q, max(1, vmem_budget_bytes // row_bytes))

    grid = (n // n_tile, c // c_tile)

    return pl.pallas_call(
        partial(_gap_kernel, inv_hw=1.0 / hw),
        out_shape=jax.ShapeDtypeStruct((n, c), x.dtype),
        grid=grid,
        in_specs=[pl.BlockSpec((n_tile, c_tile, hw), lambda i, j: (i, j, 0))],
        out_specs=pl.BlockSpec((n_tile, c_tile), lambda i, j: (i, j)),
        compiler_params=pltpu.CompilerParams(
            # Independent output tiles: shard grid across TCs (v7x megacore).
            dimension_semantics=("parallel", "parallel"),
            # Above v5e's 16 MiB scoped default; safe on v6e/v7x as well.
            vmem_limit_bytes=32 * 1024 * 1024,
        ),
        cost_estimate=pl.CostEstimate(
            flops=n * c * hw,
            transcendentals=0,
            bytes_accessed=n * c * hw * itemsize + n * c * itemsize,
        ),
    )(x_flat)


if __name__ == "__main__":
    key = jax.random.PRNGKey(0)
    k1, k2 = jax.random.split(key)

    # Small NCHW input consistent with a conv feature map: batch=2, channels=4, 16x16.
    x = jax.random.normal(k1, (2, 4, 16, 16), dtype=jnp.float32)
    out = jax.block_until_ready(global_avg_pooling(x))
    ref = x.reshape(x.shape[0], x.shape[1], -1).mean(axis=-1)
    assert out.shape == (2, 4), out.shape
    assert out.dtype == x.dtype, out.dtype
    assert jnp.allclose(out, ref, atol=1e-5, rtol=1e-5), (out, ref)

    # Exercise the multi-block (tiled) path with a deliberately tiny VMEM budget.
    x2 = jax.random.normal(k2, (2, 256, 8, 8), dtype=jnp.float32)
    out2 = jax.block_until_ready(
        global_avg_pooling(x2, vmem_budget_bytes=64 * 1024))
    ref2 = x2.reshape(2, 256, -1).mean(axis=-1)
    assert out2.shape == (2, 256), out2.shape
    assert jnp.allclose(out2, ref2, atol=1e-5, rtol=1e-5)

    print("KERNEL_OK")
</pallas_src>

<mosaic_0001>
module attributes {stable_mosaic.version = 11 : i64} {
  func.func @_gap_kernel(%arg0: i32, %arg1: i32, %arg2: memref<2x4x256xf32, #tpu.memory_space<vmem>>, %arg3: memref<2x4xf32, #tpu.memory_space<vmem>>) attributes {dimension_semantics = [#tpu.dimension_semantics<parallel>, #tpu.dimension_semantics<parallel>], iteration_bounds = array<i64: 1, 1>, scalar_prefetch = 0 : i64, scratch_operands = 0 : i64, tpu.core_type = #tpu.core_type<tc>, window_params = [{transform_indices = @transform_0, window_bounds = array<i64: 2, 4, 256>}, {transform_indices = @transform_1, window_bounds = array<i64: 2, 4>}]} {
    %c0 = arith.constant 0 : index
    %c0_0 = arith.constant 0 : index
    %c0_1 = arith.constant 0 : index
    %0 = vector.load %arg2[%c0, %c0_0, %c0_1] : memref<2x4x256xf32, #tpu.memory_space<vmem>>, vector<2x4x256xf32>
    %cst = arith.constant dense<0.000000e+00> : vector<2x4xf32>
    %1 = vector.multi_reduction <add>, %0, %cst [2] : vector<2x4x256xf32> to vector<2x4xf32>
    %cst_2 = arith.constant 3.906250e-03 : f32
    %2 = vector.broadcast %cst_2 : f32 to vector<2x4xf32>
    %3 = arith.mulf %1, %2 : vector<2x4xf32>
    %c0_3 = arith.constant 0 : index
    %c0_4 = arith.constant 0 : index
    %4 = vector.load %arg3[%c0_3, %c0_4] : memref<2x4xf32, #tpu.memory_space<vmem>>, vector<2x4xf32>
    tpu.vector_store %arg3[%c0_3, %c0_4], %3 {strides = array<i32>} : memref<2x4xf32, #tpu.memory_space<vmem>>, vector<2x4xf32>,
    return
  }
  func.func @transform_0(%arg0: i32, %arg1: i32) -> (i32, i32, i32) {
    %c0_i32 = arith.constant 0 : i32
    %c0_i32_0 = arith.constant 0 : i32
    return %arg0, %arg1, %c0_i32 : i32, i32, i32
  }
  func.func @transform_1(%arg0: i32, %arg1: i32) -> (i32, i32) {
    %c0_i32 = arith.constant 0 : i32
    return %arg0, %arg1 : i32, i32
  }
}

</mosaic_0001>

<llo_original>
// kernel: tpu_custom_call.1
$region0: #{tpu_custom_call.1}
  #allocation0 [shape = 'u32[]', space=smem, size = 0x4, offset = 0x4, fixed_abs, tag = 'smem constant byte address 0x4 - core index']
  #allocation1 [shape = 'u32[72,128]{1,0:T(1,128)}', space=vmem, size = 0x9000, scoped, tag = 'internal scratch']
  %s0 = inlined_call_operand.hbm [shape: f32[2,4,256], index: 0, kind: input, shape index: {}]
  %s1 = inlined_call_operand.hbm [shape: f32[2,4], index: 1, kind: output, shape index: {}]
  %s2 = sld [smem:[#allocation0]]
  $region18: #{tpu_custom_call.1} parent=0
    _
  %s4 = ssub.s32 1, %s2
  %s5 = scalar_select 0, %s4, %s2
  $region1: #{tpu_custom_call.1} parent=0
    #allocation2 [shape = 'u8[8192]{0}', space=vmem, size = 0x2000, scoped, tag = 'input window, operand 0, single buffered']
    #allocation3 [shape = 's32[1]{0}', space=sflag, size = 0x4, scoped, tag = 'scoped memory for tpu_custom_call.1']
    #allocation4 [shape = 's32[1]{0}', space=sflag, size = 0x4, scoped, tag = 'scoped memory for tpu_custom_call.1']
    #allocation5 [shape = 'u8[1024]{0}', space=vmem, size = 0x400, scoped, tag = 'output window, operand 0, single buffered']
    %6 = vsyncpa [#allocation3], 0
    %7 = vsyncpa [#allocation4], 0
    // Predicated region
    $region2: #{tpu_custom_call.1} parent=1 // pred_check
      _
    $region3: #{tpu_custom_call.1} parent=1 // pred_check_branch
      %9 = sbr.rel (0) target = $region5
    $region4: #{tpu_custom_call.1} parent=1 // pred_region
      %11 = vsyncadd [#allocation3], 0
      %s12 = sshll.u32 %s0, 4
      %s13 = int_to_ptr.hbm [resolvable:$true] %s12
      %s14 = sshll.u32 [#allocation2], 4
      %s15 = int_to_ptr.vmem [resolvable:$true] %s14
      %20 = dma.hbm_to_vmem [thread:$0]  %s13, 256, %s15, [#allocation3], 128, 128, 8
    $region5: #{tpu_custom_call.1} parent=1 // pred_fallthru
      _
    // Predicated region
    $region6: #{tpu_custom_call.1} parent=1 // pred_check
      _
    $region7: #{tpu_custom_call.1} parent=1 // pred_check_branch
      %22 = sbr.rel (0) target = $region9
    $region8: #{tpu_custom_call.1} parent=1 // pred_region
      %24 = dma.done [#allocation3], 256
    $region9: #{tpu_custom_call.1} parent=1 // pred_fallthru
      _
    %v25 = vld [vmem:[#allocation2] sm:$0xff]
    %v26 = vld [vmem:[#allocation2 + $0x8] sm:$0xff]
    %29 = vst [vmem:[#allocation1] ss:$2 sm:$0xff] %v25
    %v30 = vld.sshfl [vmem:[#allocation1] sm:$0xff pattern:$0x75316420]
    %v31 = vld.sshfl [vmem:[#allocation1 + $0x8] sm:$0xff pattern:$0x75316420]
    %s32 = scalar_lea.vmem [#allocation1], 16
    %33 = vst [vmem:[%s32] ss:$2 sm:$0xff] %v26
    %v34 = vld.sshfl [vmem:[#allocation1 + $0x10] sm:$0xff pattern:$0x75316420]
    %v35 = vld.sshfl [vmem:[#allocation1 + $0x18] sm:$0xff pattern:$0x75316420]
    %vm40 = vcmask 1043456
    %v41 = vsel %vm40, %v30, 0.0
    %v42 = vsel %vm40, %v31, 0.0
    %v43 = vadd.f32 %v41, %v42
    %44 = vadd.xlane.f32.xlu0 %v43
    %v45 = vpop.xlane.xlu0 %44
    %v46 = vsel %vm40, %v34, 0.0
    %v47 = vsel %vm40, %v35, 0.0
    %v48 = vadd.f32 %v46, %v47
    %49 = vadd.xlane.f32.xlu0 %v48
    %v50 = vpop.xlane.xlu0 %49
    %v51 = vmul.f32 %v45, 0.00390625
    %v52 = vmul.f32 %v50, 0.00390625
    %v55 = vlaneseq
    %v56 = vand.u32 %v55, 127
    %v57 = vperm.slane %v51, %v56
    %v58 = vperm.slane %v52, %v56
    %vm59 = vcmask 1041409
    %v60 = vsel %vm59, %v58, %v57
    %vm62 = vcmask 25600
    %63 = vst.msk [vmem:[#allocation5] sm:$0x3] %vm62, %v60
    // Predicated region
    $region10: #{tpu_custom_call.1} parent=1 // pred_check
      _
    $region11: #{tpu_custom_call.1} parent=1 // pred_check_branch
      %65 = sbr.rel (0) target = $region13
    $region12: #{tpu_custom_call.1} parent=1 // pred_region
      %67 = vsyncadd [#allocation4], 0
      %s69 = sshll.u32 [#allocation5], 4
      %s70 = int_to_ptr.vmem [resolvable:$true] %s69
      %s71 = sshll.u32 %s1, 4
      %s72 = int_to_ptr.hbm [resolvable:$true] %s71
      %74 = dma.vmem_to_hbm [thread:$0]  %s70, 32, %s72, [#allocation4]
    $region13: #{tpu_custom_call.1} parent=1 // pred_fallthru
      _
    // Predicated region
    $region14: #{tpu_custom_call.1} parent=1 // pred_check
      _
    $region15: #{tpu_custom_call.1} parent=1 // pred_check_branch
      %76 = sbr.rel (0) target = $region17
    $region16: #{tpu_custom_call.1} parent=1 // pred_region
      %78 = dma.done [#allocation4], 32
    $region17: #{tpu_custom_call.1} parent=1 // pred_fallthru
      _
    %79 = vsyncpa [#allocation3], 1
    %80 = vsyncpa [#allocation4], 1

</llo_original>
